<compile_context>
chip_gen: v5e
topology: v5e:2x2
jax: 0.10.0
libtpu: 0.0.40
codegen_flags: <defaults>
</compile_context>

<pallas_src>
import jax
import jax.numpy as jnp
import numpy as np
from jax.experimental import pallas as pl
from jax.experimental.pallas import tpu as pltpu

LANE = 128             # vreg lane width (last dim)
MAX_BLOCK_ROWS = 4096  # 4096*128*4B = 2 MiB per f32 block (1 MiB bf16)
MIN_GRID_BLOCKS = 8    # keep >= ~8 blocks so v7x's 2 TCs both get work


def mish_kernel(x_ref, o_ref):
    # Cast to f32 in-register (v5e has no bf16 VPU/EUP path); math:
    #   softplus(x) = max(x, 0) + log1p(exp(-|x|))   (numerically stable,
    #   matches torch.nn.functional.softplus incl. large-|x| behavior)
    #   mish(x)     = x * tanh(softplus(x))
    x = x_ref[...].astype(jnp.float32)
    sp = jnp.maximum(x, 0.0) + jnp.log1p(jnp.exp(-jnp.abs(x)))
    o_ref[...] = (x * jnp.tanh(sp)).astype(o_ref.dtype)


def _round_up(n, m):
    return ((n + m - 1) // m) * m


@jax.jit
def pallas_mish(x):
    shape, dtype = x.shape, x.dtype
    n = x.size

    # Present a lane-dense (rows, LANE) slab to the kernel. Only pad when the
    # element count is not a multiple of LANE (at most LANE-1 extra elements).
    rows = pl.cdiv(n, LANE)
    pad = rows * LANE - n

    # Row alignment for the *block* shape (array rows may stay ragged):
    # f32 tiles are (8,128); 16-bit dtypes pack 2 rows/sublane -> (16,128);
    # 8-bit -> (32,128).
    itemsize = jnp.dtype(dtype).itemsize
    row_align = {4: 8, 2: 16, 1: 32}.get(itemsize, 8)

    # Block sizing: big enough to amortize per-step overhead, small enough to
    # leave >= MIN_GRID_BLOCKS blocks for megacore sharding on large inputs.
    target = max(pl.cdiv(rows, MIN_GRID_BLOCKS), row_align)
    block_rows = min(MAX_BLOCK_ROWS, _round_up(target, row_align))
    num_blocks = pl.cdiv(rows, block_rows)

    xf = x.reshape(-1)
    if pad:
        xf = jnp.pad(xf, (0, pad))
    x2 = xf.reshape(rows, LANE)

    out2 = pl.pallas_call(
        mish_kernel,
        out_shape=jax.ShapeDtypeStruct((rows, LANE), dtype),
        grid=(num_blocks,),
        in_specs=[pl.BlockSpec((block_rows, LANE), lambda i: (i, 0))],
        out_specs=pl.BlockSpec((block_rows, LANE), lambda i: (i, 0)),
        compiler_params=pltpu.CompilerParams(
            dimension_semantics=("parallel",),   # shard row blocks across TCs
            vmem_limit_bytes=24 * 1024 * 1024,   # in+out double-buffered blocks
        ),
    )(x2)

    if pad:
        return out2.reshape(-1)[:n].reshape(shape)
    return out2.reshape(shape)


# ------------------------- pure-JAX reference check -------------------------
def ref_mish(x):
    xf = x.astype(jnp.float32)
    return (xf * jnp.tanh(jax.nn.softplus(xf))).astype(x.dtype)


if __name__ == "__main__":
    key = jax.random.PRNGKey(0)
    k1, k2, k3 = jax.random.split(key, 3)

    # Small shape consistent with an elementwise activation module.
    x = jax.random.normal(k1, (2, 4, 16, 16), jnp.float32) * 4.0
    out = jax.block_until_ready(pallas_mish(x))
    ref = ref_mish(x)
    assert out.shape == x.shape and out.dtype == x.dtype
    if not np.allclose(np.asarray(out), np.asarray(ref), rtol=1e-5, atol=1e-5):
        raise AssertionError("Pallas Mish mismatch vs JAX reference (f32 small)")

    # Larger, non-128-aligned shape: exercises multi-block grid, ragged last
    # block, and the (rare) pad path.
    x2 = jax.random.normal(k2, (4, 8, 63, 129), jnp.float32) * 6.0
    out2 = jax.block_until_ready(pallas_mish(x2))
    ref2 = ref_mish(x2)
    if not np.allclose(np.asarray(out2), np.asarray(ref2), rtol=1e-5, atol=1e-5):
        raise AssertionError("Pallas Mish mismatch vs JAX reference (f32 ragged)")

    # bf16 path: native-dtype I/O, f32 in-register math.
    x3 = (jax.random.normal(k3, (2, 4, 32, 32), jnp.float32) * 4.0).astype(jnp.bfloat16)
    out3 = jax.block_until_ready(pallas_mish(x3))
    ref3 = ref_mish(x3)
    if not np.allclose(np.asarray(out3, dtype=np.float32),
                       np.asarray(ref3, dtype=np.float32),
                       rtol=2e-2, atol=2e-2):
        raise AssertionError("Pallas Mish mismatch vs JAX reference (bf16)")

    print("KERNEL_OK")
</pallas_src>

<mosaic_0001>
module attributes {stable_mosaic.version = 11 : i64} {
  func.func @mish_kernel(%arg0: i32, %arg1: memref<8x128xf32, #tpu.memory_space<vmem>>, %arg2: memref<8x128xf32, #tpu.memory_space<vmem>>) attributes {dimension_semantics = [#tpu.dimension_semantics<parallel>], iteration_bounds = array<i64: 2>, scalar_prefetch = 0 : i64, scratch_operands = 0 : i64, tpu.core_type = #tpu.core_type<tc>, window_params = [{transform_indices = @transform_0, window_bounds = array<i64: 8, 128>}, {transform_indices = @transform_1, window_bounds = array<i64: 8, 128>}]} {
    %c0 = arith.constant 0 : index
    %c0_0 = arith.constant 0 : index
    %0 = vector.load %arg1[%c0, %c0_0] : memref<8x128xf32, #tpu.memory_space<vmem>>, vector<8x128xf32>
    %cst = arith.constant 0.000000e+00 : f32
    %1 = vector.broadcast %cst : f32 to vector<8x128xf32>
    %2 = arith.maximumf %0, %1 : vector<8x128xf32>
    %3 = math.absf %0 : vector<8x128xf32>
    %cst_1 = arith.constant 0.000000e+00 : f32
    %4 = vector.broadcast %cst_1 : f32 to vector<8x128xf32>
    %5 = arith.subf %4, %3 : vector<8x128xf32>
    %6 = math.exp %5 : vector<8x128xf32>
    %7 = math.log1p %6 : vector<8x128xf32>
    %8 = arith.addf %2, %7 : vector<8x128xf32>
    %9 = math.tanh %8 : vector<8x128xf32>
    %10 = arith.mulf %0, %9 : vector<8x128xf32>
    %c0_2 = arith.constant 0 : index
    %c0_3 = arith.constant 0 : index
    %11 = vector.load %arg2[%c0_2, %c0_3] : memref<8x128xf32, #tpu.memory_space<vmem>>, vector<8x128xf32>
    tpu.vector_store %arg2[%c0_2, %c0_3], %10 {strides = array<i32>} : memref<8x128xf32, #tpu.memory_space<vmem>>, vector<8x128xf32>,
    return
  }
  func.func @transform_0(%arg0: i32) -> (i32, i32) {
    %c0_i32 = arith.constant 0 : i32
    %c0_i32_0 = arith.constant 0 : i32
    return %arg0, %c0_i32 : i32, i32
  }
  func.func @transform_1(%arg0: i32) -> (i32, i32) {
    %c0_i32 = arith.constant 0 : i32
    %c0_i32_0 = arith.constant 0 : i32
    return %arg0, %c0_i32 : i32, i32
  }
}

</mosaic_0001>

<llo_original>
// kernel: pallas_mish.1
$region0: #{pallas_mish.1}
  #allocation0 [shape = 'u32[]', space=smem, size = 0x4, offset = 0x4, fixed_abs, tag = 'smem constant byte address 0x4 - core index']
  #allocation1 [shape = 'u32[72,128]{1,0:T(1,128)}', space=vmem, size = 0x9000, scoped, tag = 'internal scratch']
  %s0 = inlined_call_operand.vmem [shape: f32[16,128], index: 0, kind: input, shape index: {}]
  %s1 = inlined_call_operand.vmem [shape: f32[16,128], index: 1, kind: output, shape index: {}]
  %s2 = sld [smem:[#allocation0]]
  $region37: #{pallas_mish.1} parent=0
    _
  %s4 = ssub.s32 1, %s2
  %s5 = scalar_select 0, %s4, %s2
  loop: start=0, step=1, limit=4
  $region2: #{pallas_mish.1} parent=0 // loop_pre_header
    _
  $region3: #{pallas_mish.1} parent=0 // loop_header
    %s7 = sphi 0, %s11
    %p8 = scmp.ge.s32.totalorder %s7, 4
    %s17 = sphi 0, %s19
    %s20 = sphi 0, %s17
    %s21 = sphi 0, %s20
    %s37 = sphi 0, %s21
    %s43 = sphi 0, %s45
    %s46 = sphi 0, %s43
    %s47 = sphi 0, %s46
    %s63 = sphi 0, %s47
  $region4: #{pallas_mish.1} parent=0 // loop_header_branch
    %10 = sbr.rel (%p8) target = $region8
  $region5: #{pallas_mish.1} parent=0 // loop_body
    %s12 = ssub.s32 %s7, 1
    %s13 = ssub.s32 %s7, 2
    %s14 = sadd.s32 %s7, 1
    %s15 = ssub.s32 %s7, %s14
    %p16 = scmp.eq.s32.totalorder %s15, 0
    %s18 = sadd.s32 %s17, 1
    %s19 = scalar_select %p16, %s17, %s18
    %p22 = pneg %p16
    %p23 = scmp.eq.s32.totalorder %s7, 1
    %p24 = por %p22, %p23
    %p25 = scmp.ne.s32.totalorder %s17, %s20
    %p26 = scmp.eq.s32.totalorder %s7, 0
    %p27 = por %p25, %p26
    %p28 = scmp.ne.s32.totalorder %s17, %s20
    %p29 = scmp.eq.s32.totalorder %s12, 1
    %p30 = por %p28, %p29
    %p31 = scmp.ne.s32.totalorder %s20, %s21
    %p32 = scmp.eq.s32.totalorder %s12, 0
    %p33 = por %p31, %p32
    %p34 = scmp.ne.s32.totalorder %s20, %s21
    %p35 = scmp.eq.s32.totalorder %s13, 1
    %p36 = por %p34, %p35
    %p38 = scmp.ne.s32.totalorder %s21, %s37
    %p39 = scmp.eq.s32.totalorder %s13, 0
    %p40 = por %p38, %p39
    %s41 = ssub.s32 %s7, %s14
    %p42 = scmp.eq.s32.totalorder %s41, 0
    %s44 = sadd.s32 %s43, 1
    %s45 = scalar_select %p42, %s43, %s44
    %p48 = pneg %p42
    %p49 = scmp.eq.s32.totalorder %s7, 1
    %p50 = por %p48, %p49
    %p51 = scmp.ne.s32.totalorder %s43, %s46
    %p52 = scmp.eq.s32.totalorder %s7, 0
    %p53 = por %p51, %p52
    %p54 = scmp.ne.s32.totalorder %s43, %s46
    %p55 = scmp.eq.s32.totalorder %s12, 1
    %p56 = por %p54, %p55
    %p57 = scmp.ne.s32.totalorder %s46, %s47
    %p58 = scmp.eq.s32.totalorder %s12, 0
    %p59 = por %p57, %p58
    %p60 = scmp.ne.s32.totalorder %s46, %s47
    %p61 = scmp.eq.s32.totalorder %s13, 1
    %p62 = por %p60, %p61
    %p64 = scmp.ne.s32.totalorder %s47, %s63
    %p65 = scmp.eq.s32.totalorder %s13, 0
    %p66 = por %p64, %p65
    %p67 = scmp.le.s32.totalorder 1, %s7
    %p68 = scmp.lt.s32.totalorder %s7, 3
    %p69 = pnand %p67, %p68
    %p70 = pneg %p69
    // Predicated region
    $region9: #{pallas_mish.1} parent=5 // pred_check
      _
    $region10: #{pallas_mish.1} parent=5 // pred_check_branch
      %72 = sbr.rel (%p69) target = $region12
    $region11: #{pallas_mish.1} parent=5 // pred_region
      %s73 = ssub.s32 %s7, 1
    $region12: #{pallas_mish.1} parent=5 // pred_fallthru
      _
    %p74 = scmp.lt.s32.totalorder %s7, 2
    // Predicated region
    $region13: #{pallas_mish.1} parent=5 // pred_check
      %p75 = pneg %p74
    $region14: #{pallas_mish.1} parent=5 // pred_check_branch
      %77 = sbr.rel (%p75) target = $region16
    $region15: #{pallas_mish.1} parent=5 // pred_region
      // Predicated region
      $region17: #{pallas_mish.1} parent=15 // pred_check
        %p78 = pneg %p27
      $region18: #{pallas_mish.1} parent=15 // pred_check_branch
        %80 = sbr.rel (%p78) target = $region20
      $region19: #{pallas_mish.1} parent=15 // pred_region
        %p81 = scmp.lt.s32.totalorder %s7, 1
        %s82 = scalar_select %p81, %s7, 1
        %s83 = smul.addr %s82, 8
        %s84 = scalar_lea.vmem %s0, %s83
      $region20: #{pallas_mish.1} parent=15 // pred_fallthru
        _
    $region16: #{pallas_mish.1} parent=5 // pred_fallthru
      _
    %p85 = scmp.le.s32.totalorder 1, %s7
    %p86 = scmp.lt.s32.totalorder %s7, 3
    %p87 = pnand %p85, %p86
    %p88 = pneg %p87
    // Predicated region
    $region21: #{pallas_mish.1} parent=5 // pred_check
      _
    $region22: #{pallas_mish.1} parent=5 // pred_check_branch
      %90 = sbr.rel (%p87) target = $region24
    $region23: #{pallas_mish.1} parent=5 // pred_region
      %s91 = ssub.s32 %s7, 1
      %p92 = scmp.lt.s32.totalorder %s12, 1
      %s93 = scalar_select %p92, %s12, 1
      %s94 = smul.addr %s93, 8
      %s95 = scalar_lea.vmem %s0, %s94
      %p96 = pneg %p33
      %p97 = pneg %p30
      %p98 = pneg %p59
      %p99 = pneg %p56
      %p100 = scmp.lt.s32.totalorder %s12, 1
      %s101 = scalar_select %p100, %s12, 1
      %s102 = smul.addr %s101, 8
      %s103 = scalar_lea.vmem %s1, %s102
      %p104 = scmp.lt.s32.totalorder %s12, 1
      %s105 = scalar_select %p104, %s12, 1
      %s106 = smul.addr %s105, 8
      %s107 = scalar_lea.vmem %s0, %s106
      %p108 = scmp.lt.s32.totalorder %s12, 1
      %s109 = scalar_select %p108, %s12, 1
      %s110 = smul.addr %s109, 8
      %s111 = scalar_lea.vmem %s1, %s110
      %v112 = vld [vmem:[%s107] sm:$0xff]
      %v113 = vmax.f32 %v112, 0.0
      %v114 = vand.u32 2147483647, %v112
      %v115 = vsub.f32 0.0, %v114
      %v116 = vmul.f32 %v115, 1.442695
      %v117 = vpow.pop %v116
      %v118 = vadd.f32 %v117, 1.0
      %v119 = vlog2.pop %v118
      %v120 = vmul.f32 %v119, 0.6931472
      %v121 = vmul.f32 -0.5, %v117
      %v122 = vadd.f32 %v121, 1.0
      %v123 = vmul.f32 %v122, %v117
      %v124 = vand.u32 2147483647, %v117
      %vm125 = vcmp.lt.f32.partialorder %v124, 0.0004427343
      %v126 = vsel %vm125, %v123, %v120
      %v127 = vadd.f32 %v113, %v126
      %v128 = vtanh.pop %v127
      %v129 = vmul.f32 %v112, %v128
      %130 = vst [vmem:[%s111] sm:$0xff] %v129
      %p131 = scmp.lt.s32.totalorder %s12, 1
      %s132 = scalar_select %p131, %s12, 1
      %s133 = smul.addr %s132, 8
      %s134 = scalar_lea.vmem %s1, %s133
      // Predicated region
      $region25: #{pallas_mish.1} parent=23 // pred_check
        %p135 = pneg %p56
      $region26: #{pallas_mish.1} parent=23 // pred_check_branch
        %137 = sbr.rel (%p135) target = $region28
      $region27: #{pallas_mish.1} parent=23 // pred_region
        _
      $region28: #{pallas_mish.1} parent=23 // pred_fallthru
        _
    $region24: #{pallas_mish.1} parent=5 // pred_fallthru
      _
    %p138 = scmp.le.s32.totalorder 2, %s7
    // Predicated region
    $region29: #{pallas_mish.1} parent=5 // pred_check
      %p139 = pneg %p138
    $region30: #{pallas_mish.1} parent=5 // pred_check_branch
      %141 = sbr.rel (%p139) target = $region32
    $region31: #{pallas_mish.1} parent=5 // pred_region
      %s142 = ssub.s32 %s7, 2
      // Predicated region
      $region33: #{pallas_mish.1} parent=31 // pred_check
        %p143 = pneg %p62
      $region34: #{pallas_mish.1} parent=31 // pred_check_branch
        %145 = sbr.rel (%p143) target = $region36
      $region35: #{pallas_mish.1} parent=31 // pred_region
        %p146 = scmp.lt.s32.totalorder %s13, 1
        %s147 = scalar_select %p146, %s13, 1
        %s148 = smul.addr %s147, 8
        %s149 = scalar_lea.vmem %s1, %s148
      $region36: #{pallas_mish.1} parent=31 // pred_fallthru
        _
    $region32: #{pallas_mish.1} parent=5 // pred_fallthru
      _
  $region6: #{pallas_mish.1} parent=0 // loop_footer
    %s11 = sadd.s32 1, %s7
  $region7: #{pallas_mish.1} parent=0 // loop_footer_branch
    %6 = sbr.rel target = $region3
  $region8: #{pallas_mish.1} parent=0 // loop_exit
    _

</llo_original>
